<compile_context>
chip_gen: v7x
topology: tpu7x:2x2x1
jax: 0.10.0
libtpu: 0.0.40
codegen_flags: <defaults>
</compile_context>

<pallas_src>
import functools

import jax
import jax.numpy as jnp
from jax import lax
from jax.experimental import pallas as pl
from jax.experimental.pallas import tpu as pltpu


def _pool_kernel(x_ref, o_ref, *, mode, H, W, K):
    """3x3 pool (stride 1, padding 1) on a (BLOCK_NC, H*W) lane-dense block.

    Each row of the block is one (n, c) image flattened row-major, so a
    horizontal neighbour is a lane shift of +/-1 and a vertical neighbour is a
    lane shift of +/-W (masked at image borders).  The pool is row-local in
    this layout, so no halo is needed across the NC grid axis.
    """
    blk_nc, HW = x_ref.shape

    # Native-dtype load, f32 compute (v5e has no bf16 VALU; upcast is free
    # filler on v6e/v7x under DMA).
    x = x_ref[...].astype(jnp.float32)

    col = lax.broadcasted_iota(jnp.int32, (blk_nc, HW), 1)
    wcol = jnp.bitwise_and(col, W - 1) if (W & (W - 1)) == 0 else col % W
    has_l = wcol > 0                 # valid left neighbour  (w > 0)
    has_r = wcol < W - 1             # valid right neighbour (w < W-1)
    has_u = col >= W                 # valid up neighbour    (h > 0)
    has_d = col < (H - 1) * W        # valid down neighbour  (h < H-1)

    # Lane rotations (XLU). Wrapped lanes are masked out below, so only the
    # rotation amount mod HW matters (positive shifts only, for safety).
    left = pltpu.roll(x, 1, 1)            # x[..., j-1]
    right = pltpu.roll(x, HW - 1, 1)      # x[..., j+1]

    if mode == "avg":
        # AvgPool2d(padding=1) default count_include_pad=True:
        # zero padding, constant divisor K*K.
        hp = x + jnp.where(has_l, left, 0.0) + jnp.where(has_r, right, 0.0)
        up = pltpu.roll(hp, W, 1)          # hp[..., j-W]
        down = pltpu.roll(hp, HW - W, 1)   # hp[..., j+W]
        v = hp + jnp.where(has_u, up, 0.0) + jnp.where(has_d, down, 0.0)
        o_ref[...] = (v * jnp.float32(1.0 / (K * K))).astype(o_ref.dtype)
    else:
        # MaxPool2d: out-of-window taps fall back to the centre value,
        # equivalent to -inf padding.
        hp = jnp.maximum(x, jnp.maximum(jnp.where(has_l, left, x),
                                        jnp.where(has_r, right, x)))
        up = pltpu.roll(hp, W, 1)
        down = pltpu.roll(hp, HW - W, 1)
        v = jnp.maximum(hp, jnp.maximum(jnp.where(has_u, up, hp),
                                        jnp.where(has_d, down, hp)))
        o_ref[...] = v.astype(o_ref.dtype)


def _choose_block_nc(nc, hw, itemsize):
    """Largest multiple-of-8 divisor of `nc` whose block stays <= ~4 MiB.

    Double-buffering input + output costs ~4x block bytes; 4 MiB blocks keep
    that well under v7x's 32 MiB scoped VMEM while being large enough
    (>= 512 KiB once nc is big) to sit near the HBM roofline on v5e/v6e/v7x.
    """
    max_block_bytes = 4 * 1024 * 1024
    row_bytes = hw * itemsize
    cap = max(8, (max_block_bytes // max(row_bytes, 1)) // 8 * 8)
    block, d = 8, 8
    while d <= min(nc, cap):
        if nc % d == 0:
            block = d
        d += 8
    return block


def pool_branch_forward(x_nchw, avg_or_max, kernel_size=3, stride=1):
    """PoolBranch.forward: NCHW in / NCHW out (same dtype as input)."""
    assert avg_or_max in ("avg", "max"), "PoolBranch mode must be 'avg' or 'max'"
    # TODO(synk): only kernel_size=3 / stride=1 (the 'same'-size config the
    #             module uses with padding=1) is implemented; fail loudly.
    assert kernel_size == 3, "only kernel_size=3 (padding=1 'same') implemented"
    assert stride == 1, "only stride=1 implemented"

    N, C, H, W = x_nchw.shape
    NC, HW = N * C, H * W
    # Lane-dense layout guarantees (unmasked full-lane loads/stores).
    assert NC % 8 == 0, f"N*C={NC} must be a multiple of 8 (sublane tiling)"
    assert HW % 128 == 0, f"H*W={HW} must be a multiple of 128 (lane tiling)"

    # Free row-major reshape to the lane-dense (N*C, H*W) working layout.
    # NOTE: no dtype cast here; the kernel handles native-dtype I/O.
    x2 = x_nchw.reshape(NC, HW)

    block_nc = _choose_block_nc(NC, HW, x2.dtype.itemsize)
    grid = (NC // block_nc,)
    spec = pl.BlockSpec((block_nc, HW), lambda i: (i, 0))

    out = pl.pallas_call(
        functools.partial(_pool_kernel, mode=avg_or_max, H=H, W=W,
                          K=kernel_size),
        out_shape=jax.ShapeDtypeStruct((NC, HW), x2.dtype),
        grid=grid,
        in_specs=[spec],
        out_specs=spec,
        compiler_params=pltpu.CompilerParams(
            dimension_semantics=("parallel",)),
    )(x2)
    return out.reshape(N, C, H, W)


def reference_forward(x_nchw, avg_or_max, kernel_size=3, stride=1):
    """Pure-JAX reference replicating the PyTorch pooling semantics."""
    pad = [(0, 0), (0, 0), (1, 1), (1, 1)]
    xf = x_nchw.astype(jnp.float32)
    if avg_or_max == "avg":
        s = lax.reduce_window(xf, 0.0, lax.add, (1, 1, kernel_size, kernel_size),
                              (1, 1, stride, stride), pad)
        return (s / float(kernel_size * kernel_size)).astype(x_nchw.dtype)
    r = lax.reduce_window(xf, -jnp.inf, lax.max,
                          (1, 1, kernel_size, kernel_size),
                          (1, 1, stride, stride), pad)
    return r.astype(x_nchw.dtype)


if __name__ == "__main__":
    key = jax.random.PRNGKey(0)
    N, C, H, W = 2, 4, 16, 16
    x = jax.random.normal(key, (N, C, H, W), dtype=jnp.float32)

    for mode in ("avg", "max"):
        out = jax.block_until_ready(pool_branch_forward(x, mode))
        ref = reference_forward(x, mode)
        assert out.shape == (N, C, H, W)
        assert out.dtype == x.dtype
        assert jnp.allclose(out, ref, atol=1e-5, rtol=1e-5), (
            f"{mode}: max abs diff = {jnp.max(jnp.abs(out - ref))}")

    print("KERNEL_OK")
</pallas_src>

<mosaic_0001>
module attributes {stable_mosaic.version = 11 : i64} {
  func.func @_pool_kernel(%arg0: i32, %arg1: memref<8x256xf32, #tpu.memory_space<vmem>>, %arg2: memref<8x256xf32, #tpu.memory_space<vmem>>) attributes {dimension_semantics = [#tpu.dimension_semantics<parallel>], iteration_bounds = array<i64: 1>, scalar_prefetch = 0 : i64, scratch_operands = 0 : i64, tpu.core_type = #tpu.core_type<tc>, window_params = [{transform_indices = @transform_0, window_bounds = array<i64: 8, 256>}, {transform_indices = @transform_1, window_bounds = array<i64: 8, 256>}]} {
    %c0 = arith.constant 0 : index
    %c0_0 = arith.constant 0 : index
    %0 = vector.load %arg1[%c0, %c0_0] : memref<8x256xf32, #tpu.memory_space<vmem>>, vector<8x256xf32>
    %1 = tpu.iota {dimensions = array<i32: 1>} : vector<8x256xi32>
    %c15_i32 = arith.constant 15 : i32
    %2 = vector.broadcast %c15_i32 : i32 to vector<8x256xi32>
    %3 = arith.andi %1, %2 : vector<8x256xi32>
    %c0_i32 = arith.constant 0 : i32
    %4 = vector.broadcast %c0_i32 : i32 to vector<8x256xi32>
    %5 = arith.cmpi sgt, %3, %4 : vector<8x256xi32>
    %c15_i32_1 = arith.constant 15 : i32
    %6 = vector.broadcast %c15_i32_1 : i32 to vector<8x256xi32>
    %7 = arith.cmpi slt, %3, %6 : vector<8x256xi32>
    %c16_i32 = arith.constant 16 : i32
    %8 = vector.broadcast %c16_i32 : i32 to vector<8x256xi32>
    %9 = arith.cmpi sge, %1, %8 : vector<8x256xi32>
    %c240_i32 = arith.constant 240 : i32
    %10 = vector.broadcast %c240_i32 : i32 to vector<8x256xi32>
    %11 = arith.cmpi slt, %1, %10 : vector<8x256xi32>
    %c1_i32 = arith.constant 1 : i32
    %12 = tpu.dynamic_rotate %0 by %c1_i32 dim 1 : vector<8x256xf32>, i32 -> vector<8x256xf32>
    %c255_i32 = arith.constant 255 : i32
    %13 = tpu.dynamic_rotate %0 by %c255_i32 dim 1 : vector<8x256xf32>, i32 -> vector<8x256xf32>
    %cst = arith.constant 0.000000e+00 : f32
    %14 = vector.broadcast %cst : f32 to vector<8x256xf32>
    %15 = arith.select %5, %12, %14 : vector<8x256xi1>, vector<8x256xf32>
    %16 = arith.addf %0, %15 : vector<8x256xf32>
    %cst_2 = arith.constant 0.000000e+00 : f32
    %17 = vector.broadcast %cst_2 : f32 to vector<8x256xf32>
    %18 = arith.select %7, %13, %17 : vector<8x256xi1>, vector<8x256xf32>
    %19 = arith.addf %16, %18 : vector<8x256xf32>
    %c16_i32_3 = arith.constant 16 : i32
    %20 = tpu.dynamic_rotate %19 by %c16_i32_3 dim 1 : vector<8x256xf32>, i32 -> vector<8x256xf32>
    %c240_i32_4 = arith.constant 240 : i32
    %21 = tpu.dynamic_rotate %19 by %c240_i32_4 dim 1 : vector<8x256xf32>, i32 -> vector<8x256xf32>
    %cst_5 = arith.constant 0.000000e+00 : f32
    %22 = vector.broadcast %cst_5 : f32 to vector<8x256xf32>
    %23 = arith.select %9, %20, %22 : vector<8x256xi1>, vector<8x256xf32>
    %24 = arith.addf %19, %23 : vector<8x256xf32>
    %cst_6 = arith.constant 0.000000e+00 : f32
    %25 = vector.broadcast %cst_6 : f32 to vector<8x256xf32>
    %26 = arith.select %11, %21, %25 : vector<8x256xi1>, vector<8x256xf32>
    %27 = arith.addf %24, %26 : vector<8x256xf32>
    %cst_7 = arith.constant 0.111111112 : f32
    %28 = vector.broadcast %cst_7 : f32 to vector<8x256xf32>
    %29 = arith.mulf %27, %28 : vector<8x256xf32>
    %c0_8 = arith.constant 0 : index
    %c0_9 = arith.constant 0 : index
    %30 = vector.load %arg2[%c0_8, %c0_9] : memref<8x256xf32, #tpu.memory_space<vmem>>, vector<8x256xf32>
    tpu.vector_store %arg2[%c0_8, %c0_9], %29 {strides = array<i32>} : memref<8x256xf32, #tpu.memory_space<vmem>>, vector<8x256xf32>,
    return
  }
  func.func @transform_0(%arg0: i32) -> (i32, i32) {
    %c0_i32 = arith.constant 0 : i32
    %c0_i32_0 = arith.constant 0 : i32
    return %arg0, %c0_i32 : i32, i32
  }
  func.func @transform_1(%arg0: i32) -> (i32, i32) {
    %c0_i32 = arith.constant 0 : i32
    %c0_i32_0 = arith.constant 0 : i32
    return %arg0, %c0_i32 : i32, i32
  }
}

</mosaic_0001>

<llo_original>
// kernel: tpu_custom_call.1
$region0: #{tpu_custom_call.1}
  #allocation0 [shape = 'u32[]', space=smem, size = 0x4, offset = 0x4, fixed_abs, tag = 'smem constant byte address 0x4 - core index']
  #allocation1 [shape = 'u32[144,128]{1,0:T(1,128)}', space=vmem, size = 0x12000, scoped, tag = 'internal scratch']
  %s0 = inlined_call_operand.hbm [shape: f32[8,256], index: 0, kind: input, shape index: {}]
  %s1 = inlined_call_operand.hbm [shape: f32[8,256], index: 1, kind: output, shape index: {}]
  %s2 = sld [smem:[#allocation0]]
  $region18: #{tpu_custom_call.1} parent=0
    _
  %s4 = ssub.s32 1, %s2
  %s5 = scalar_select 0, %s4, %s2
  $region1: #{tpu_custom_call.1} parent=0
    #allocation2 [shape = 'u8[8192]{0}', space=vmem, size = 0x2000, scoped, tag = 'input window, operand 0, single buffered']
    #allocation3 [shape = 's32[1]{0}', space=sflag, size = 0x4, scoped, tag = 'scoped memory for tpu_custom_call.1']
    #allocation4 [shape = 's32[1]{0}', space=sflag, size = 0x4, scoped, tag = 'scoped memory for tpu_custom_call.1']
    #allocation5 [shape = 'u8[8192]{0}', space=vmem, size = 0x2000, scoped, tag = 'output window, operand 0, single buffered']
    %6 = vsyncpa [#allocation3], 0
    %7 = vsyncpa [#allocation4], 0
    // Predicated region
    $region2: #{tpu_custom_call.1} parent=1 // pred_check
      _
    $region3: #{tpu_custom_call.1} parent=1 // pred_check_branch
      %9 = sbr.rel (0) target = $region5
    $region4: #{tpu_custom_call.1} parent=1 // pred_region
      %s11 = ssub.s32 256, 256
      %12 = vsyncadd [#allocation3], %s11
      %s14 = sshll.u32 [#allocation2], 4
      %s15 = int_to_ptr.vmem [resolvable:$true] %s14
      %17 = dma.hbm_to_vmem [thread:$0]  %s0, 256, %s15, [#allocation3]
    $region5: #{tpu_custom_call.1} parent=1 // pred_fallthru
      _
    // Predicated region
    $region6: #{tpu_custom_call.1} parent=1 // pred_check
      _
    $region7: #{tpu_custom_call.1} parent=1 // pred_check_branch
      %19 = sbr.rel (0) target = $region9
    $region8: #{tpu_custom_call.1} parent=1 // pred_region
      %20 = dma.done [#allocation3], 256
    $region9: #{tpu_custom_call.1} parent=1 // pred_fallthru
      _
    %v21 = vld [vmem:[#allocation2] sm:$0xff]
    %v22 = vld [vmem:[#allocation2 + $0x8] sm:$0xff]
    %v23 = vlaneseq
    %v24 = vand.u32 %v23, 127
    %v25 = vadd.s32 %v24, 128
    %v26 = vand.u32 %v24, 15
    %v27 = vand.u32 %v25, 15
    %vm28 = vcmp.gt.s32.totalorder %v26, 0
    %vm29 = vcmp.gt.s32.totalorder %v27, 0
    %vm30 = vcmp.lt.s32.totalorder %v26, 15
    %vm31 = vcmp.lt.s32.totalorder %v27, 15
    %vm32 = vcmp.ge.s32.totalorder %v24, 16
    %vm33 = vcmp.ge.s32.totalorder %v25, 16
    %vm34 = vcmp.lt.s32.totalorder %v24, 240
    %vm35 = vcmp.lt.s32.totalorder %v25, 240
    %36 = vrot.lane.b32.xlu0 %v21, 1
    %v37 = vpop.permute.xlu0 %36
    %38 = vrot.lane.b32.xlu0 %v22, 1
    %v39 = vpop.permute.xlu0 %38
    %vm40 = vcmp.lt.s32.totalorder %v24, 1
    %v41 = vsel %vm40, %v37, %v39
    %v42 = vsel %vm40, %v39, %v37
    %43 = vrot.lane.b32.xlu0 %v21, 127
    %v44 = vpop.permute.xlu0 %43
    %45 = vrot.lane.b32.xlu0 %v22, 127
    %v46 = vpop.permute.xlu0 %45
    %vm47 = vcmp.lt.s32.totalorder %v24, 127
    %v48 = vsel %vm47, %v44, %v46
    %v49 = vsel %vm47, %v46, %v44
    %v50 = vsel %vm28, %v42, 0.0
    %v51 = vsel %vm29, %v41, 0.0
    %v52 = vadd.f32 %v21, %v50
    %v53 = vadd.f32 %v22, %v51
    %v54 = vsel %vm30, %v48, 0.0
    %v55 = vsel %vm31, %v49, 0.0
    %v56 = vadd.f32 %v52, %v54
    %v57 = vadd.f32 %v53, %v55
    %58 = vrot.lane.b32.xlu0 %v56, 16
    %v59 = vpop.permute.xlu0 %58
    %60 = vrot.lane.b32.xlu0 %v57, 16
    %v61 = vpop.permute.xlu0 %60
    %vm62 = vcmp.lt.s32.totalorder %v24, 16
    %v63 = vsel %vm62, %v59, %v61
    %v64 = vsel %vm62, %v61, %v59
    %65 = vrot.lane.b32.xlu0 %v56, 112
    %v66 = vpop.permute.xlu0 %65
    %67 = vrot.lane.b32.xlu0 %v57, 112
    %v68 = vpop.permute.xlu0 %67
    %vm69 = vcmp.lt.s32.totalorder %v24, 112
    %v70 = vsel %vm69, %v66, %v68
    %v71 = vsel %vm69, %v68, %v66
    %v72 = vsel %vm32, %v64, 0.0
    %v73 = vsel %vm33, %v63, 0.0
    %v74 = vadd.f32 %v56, %v72
    %v75 = vadd.f32 %v57, %v73
    %v76 = vsel %vm34, %v70, 0.0
    %v77 = vsel %vm35, %v71, 0.0
    %v78 = vadd.f32 %v74, %v76
    %v79 = vadd.f32 %v75, %v77
    %v80 = vmul.f32 %v78, 0.11111111
    %v81 = vmul.f32 %v79, 0.11111111
    %82 = vst [vmem:[#allocation5] sm:$0xff] %v80
    %83 = vst [vmem:[#allocation5 + $0x8] sm:$0xff] %v81
    // Predicated region
    $region10: #{tpu_custom_call.1} parent=1 // pred_check
      _
    $region11: #{tpu_custom_call.1} parent=1 // pred_check_branch
      %85 = sbr.rel (0) target = $region13
    $region12: #{tpu_custom_call.1} parent=1 // pred_region
      %s87 = ssub.s32 256, 256
      %88 = vsyncadd [#allocation4], %s87
      %s90 = sshll.u32 [#allocation5], 4
      %s91 = int_to_ptr.vmem [resolvable:$true] %s90
      %93 = dma.vmem_to_hbm [thread:$0]  %s91, 256, %s1, [#allocation4]
    $region13: #{tpu_custom_call.1} parent=1 // pred_fallthru
      _
    // Predicated region
    $region14: #{tpu_custom_call.1} parent=1 // pred_check
      _
    $region15: #{tpu_custom_call.1} parent=1 // pred_check_branch
      %95 = sbr.rel (0) target = $region17
    $region16: #{tpu_custom_call.1} parent=1 // pred_region
      %96 = dma.done [#allocation4], 256
    $region17: #{tpu_custom_call.1} parent=1 // pred_fallthru
      _
    %97 = vsyncpa [#allocation3], 1
    %98 = vsyncpa [#allocation4], 1

</llo_original>
